<compile_context>
chip_gen: v7x
topology: tpu7x:2x2x1
jax: 0.10.0
libtpu: 0.0.40
codegen_flags: <defaults>
</compile_context>

<pallas_src>
import functools

import jax
import jax.numpy as jnp
from jax import lax
from jax.experimental import pallas as pl
from jax.experimental.pallas import tpu as pltpu

_LANE = 128
_SUBLANE = 8
_FEAT_CHUNK = 8   # features per inner chunk (bounds the vreg live set)


def _ntxent_manhattan_kernel(zis_ref, zjs_rows_ref, zjsT_ref, out_ref,
                             zis_n_sc, zjsT_n_sc, m_sc, l_sc, diag_sc,
                             *, inv_temp, num_valid_cols, mask_cols):
    j = pl.program_id(1)
    nj = pl.num_programs(1)

    eps2 = jnp.float32(1e-24)                # (F.normalize eps = 1e-12) ** 2
    neg_inv_temp = jnp.float32(-inv_temp)    # hoisted 1/temperature

    TM, D = zis_ref.shape
    TN_BLK = zjsT_ref.shape[1]
    NC = TN_BLK // _LANE                     # 128-lane sub-chunks per column block

    # ---- once per row tile (j == 0): normalize zis rows into scratch,
    #      compute the diagonal, init the online-LSE state.
    @pl.when(j == 0)
    def _init():
        zis = zis_ref[...].astype(jnp.float32)
        inv_ni = lax.rsqrt(jnp.maximum(                       # EUP rsqrt, free slot
            jnp.sum(zis * zis, axis=1, keepdims=True), eps2))  # (TM, 1)
        zis_n = zis * inv_ni
        zis_n_sc[...] = zis_n

        # diag sim[i,i] directly from the (TM, D) operands (no eye mask).
        zr = zjs_rows_ref[...].astype(jnp.float32)
        inv_nr = lax.rsqrt(jnp.maximum(
            jnp.sum(zr * zr, axis=1, keepdims=True), eps2))
        zr_n = zr * inv_nr
        diag_sc[...] = neg_inv_temp * jnp.sum(jnp.abs(zis_n - zr_n),
                                              axis=1, keepdims=True)

        m_sc[...] = jnp.full((TM, 1), -jnp.inf, dtype=jnp.float32)
        l_sc[...] = jnp.zeros((TM, 1), dtype=jnp.float32)

    # ---- per column block: normalize the (D, TN_BLK) zjs^T tile into scratch
    #      (feature axis on sublanes so the reduce is a cheap cross-sublane sum).
    zjsT = zjsT_ref[...].astype(jnp.float32)
    inv_ncol = lax.rsqrt(jnp.maximum(
        jnp.sum(zjsT * zjsT, axis=0, keepdims=True), eps2))    # (1, TN_BLK)
    zjsT_n_sc[...] = zjsT * inv_ncol

    # ---- Manhattan distance per 128-lane sub-chunk + online logsumexp.
    # Accumulator (TM, 128) stays in vregs; operands are re-read from VMEM
    # scratch in 8-feature chunks, bounding the live set for large D.
    # TODO(synk): packed-bf16 sub/abs for v6e/v7x (skipped: numerics risk).
    for c in range(NC):
        c0 = c * _LANE
        man = jnp.zeros((TM, _LANE), dtype=jnp.float32)
        d0 = 0
        while d0 < D:
            f = min(_FEAT_CHUNK, D - d0)
            zi_chunk = zis_n_sc[:, d0:d0 + f]                       # (TM, f)
            for k in range(f):
                zj_row = zjsT_n_sc[d0 + k:d0 + k + 1, c0:c0 + _LANE]  # (1, 128)
                man = man + jnp.abs(zi_chunk[:, k:k + 1] - zj_row)
            d0 += f

        sim = neg_inv_temp * man                                    # (TM, 128)

        if mask_cols:
            # Padded (j >= B) columns contribute nothing to the logsumexp.
            col_ids = lax.broadcasted_iota(jnp.int32, (TM, _LANE), 1) \
                + (j * TN_BLK + c0)
            sim = jnp.where(col_ids < num_valid_cols, sim, -jnp.inf)

        # online (flash-style) logsumexp update.  The first processed chunk
        # (j == 0, c == 0) always contains at least one real column, so m
        # becomes finite immediately and no inf-inf path is reachable.
        m_prev = m_sc[...]
        m_new = jnp.maximum(m_prev, jnp.max(sim, axis=1, keepdims=True))
        alpha = jnp.exp(m_prev - m_new)
        l_sc[...] = alpha * l_sc[...] + jnp.sum(jnp.exp(sim - m_new),
                                                axis=1, keepdims=True)
        m_sc[...] = m_new

    @pl.when(j == nj - 1)
    def _finalize():
        out_ref[...] = (m_sc[...] + jnp.log(l_sc[...])) - diag_sc[...]


def _round_up(x, m):
    return ((x + m - 1) // m) * m


def ntxent_loss_manhattan(zis, zjs, temperature):
    B, D = zis.shape
    assert zjs.shape == (B, D)

    # --- row (i) tiling: multiple-of-8 rows; >=2 row tiles when possible so
    # both v7x TensorCores get work on the "parallel" grid axis.
    bpad_i = _round_up(B, _SUBLANE)
    if bpad_i <= _SUBLANE:
        tm = bpad_i
    else:
        tm = min(128, _round_up((bpad_i + 1) // 2, _SUBLANE))
        bpad_i = _round_up(bpad_i, tm)

    # --- column (j) tiling: lane axis padded to a multiple of 128; wide
    # (k*128)-lane column blocks amortize grid-step overhead and DMA size
    # while the in-kernel sub-chunk loop keeps the accumulator at (TM, 128).
    bpad_j = _round_up(B, _LANE)
    n128 = bpad_j // _LANE
    nc = next(c for c in (4, 2, 1) if n128 % c == 0)
    tn_blk = nc * _LANE

    inv_temp = 1.0 / float(temperature)
    mask_cols = bpad_j != B

    zis_p = jnp.pad(zis, ((0, bpad_i - B), (0, 0)))
    zjs_rows_p = jnp.pad(zjs, ((0, bpad_i - B), (0, 0)))
    # Layout plumbing: lane-dense j axis for the (TM, 128) distance accumulator.
    zjs_t_p = jnp.pad(jnp.transpose(zjs), ((0, 0), (0, bpad_j - B)))

    grid = (bpad_i // tm, bpad_j // tn_blk)

    per_row = pl.pallas_call(
        functools.partial(_ntxent_manhattan_kernel, inv_temp=inv_temp,
                          num_valid_cols=B, mask_cols=mask_cols),
        out_shape=jax.ShapeDtypeStruct((bpad_i, 1), jnp.float32),
        grid_spec=pltpu.PrefetchScalarGridSpec(
            num_scalar_prefetch=0,
            grid=grid,
            in_specs=[
                pl.BlockSpec((tm, D), lambda i, j: (i, 0)),       # zis row tile
                pl.BlockSpec((tm, D), lambda i, j: (i, 0)),       # zjs rows (diag)
                pl.BlockSpec((D, tn_blk), lambda i, j: (0, j)),   # zjs^T columns
            ],
            out_specs=pl.BlockSpec((tm, 1), lambda i, j: (i, 0)),
            scratch_shapes=[
                pltpu.VMEM((tm, D), jnp.float32),       # normalized zis (per row tile)
                pltpu.VMEM((D, tn_blk), jnp.float32),   # normalized zjs^T (per step)
                pltpu.VMEM((tm, 1), jnp.float32),       # m (running max)
                pltpu.VMEM((tm, 1), jnp.float32),       # l (running sum)
                pltpu.VMEM((tm, 1), jnp.float32),       # diag
            ]),
        compiler_params=pltpu.CompilerParams(
            # j (axis 1) must stay "arbitrary": the m/l/diag/zis_n scratch
            # accumulator pattern relies on sequential column tiles.
            dimension_semantics=("parallel", "arbitrary"),
            # Sized with v7x's 64 MiB VMEM in mind; blocks + scratch here are
            # well under a few MiB even with the wide (D, 4*128) column blocks.
            vmem_limit_bytes=32 << 20),
    )(zis_p, zjs_rows_p, zjs_t_p)

    # Mean over the B real rows only (padded rows excluded); kept outside the
    # kernel so parallel row tiles never contend on a scalar accumulator.
    return jnp.mean(per_row[:B, 0])


def _reference(zis, zjs, temperature):
    # Pure-JAX reference mirroring the PyTorch forward.
    eps = 1e-12
    zis_n = zis / jnp.maximum(jnp.linalg.norm(zis, axis=1, keepdims=True), eps)
    zjs_n = zjs / jnp.maximum(jnp.linalg.norm(zjs, axis=1, keepdims=True), eps)
    man = jnp.sum(jnp.abs(zis_n[:, None, :] - zjs_n[None, :, :]), axis=-1)
    sim = -man / temperature
    lse = jax.scipy.special.logsumexp(sim, axis=1)
    diag = jnp.diagonal(sim)
    return jnp.mean(lse - diag)


if __name__ == "__main__":
    B, D = 8, 32
    temperature = 0.5
    key = jax.random.PRNGKey(0)
    k1, k2 = jax.random.split(key)
    zis = jax.random.normal(k1, (B, D), dtype=jnp.float32)
    zjs = jax.random.normal(k2, (B, D), dtype=jnp.float32)

    loss = jax.block_until_ready(ntxent_loss_manhattan(zis, zjs, temperature))
    ref = jax.block_until_ready(_reference(zis, zjs, temperature))

    assert jnp.allclose(loss, ref, rtol=1e-4, atol=1e-5), (loss, ref)
    print("KERNEL_OK")
</pallas_src>

<mosaic_0001>
module attributes {stable_mosaic.version = 11 : i64} {
  func.func @_ntxent_manhattan_kernel(%arg0: i32, %arg1: i32, %arg2: memref<8x32xf32, #tpu.memory_space<vmem>>, %arg3: memref<8x32xf32, #tpu.memory_space<vmem>>, %arg4: memref<32x128xf32, #tpu.memory_space<vmem>>, %arg5: memref<8x1xf32, #tpu.memory_space<vmem>>, %arg6: memref<8x32xf32, #tpu.memory_space<vmem>>, %arg7: memref<32x128xf32, #tpu.memory_space<vmem>>, %arg8: memref<8x1xf32, #tpu.memory_space<vmem>>, %arg9: memref<8x1xf32, #tpu.memory_space<vmem>>, %arg10: memref<8x1xf32, #tpu.memory_space<vmem>>) attributes {dimension_semantics = [#tpu.dimension_semantics<parallel>, #tpu.dimension_semantics<arbitrary>], iteration_bounds = array<i64: 1, 1>, scalar_prefetch = 0 : i64, scratch_operands = 5 : i64, tpu.core_type = #tpu.core_type<tc>, window_params = [{transform_indices = @transform_0, window_bounds = array<i64: 8, 32>}, {transform_indices = @transform_1, window_bounds = array<i64: 8, 32>}, {transform_indices = @transform_2, window_bounds = array<i64: 32, 128>}, {transform_indices = @transform_3, window_bounds = array<i64: 8, 1>}]} {
    %c0_i32 = arith.constant 0 : i32
    %0 = arith.cmpi eq, %arg1, %c0_i32 : i32
    %1 = arith.extui %0 : i1 to i32
    %cst = arith.constant 1.000000e-24 : f32
    %cst_0 = arith.constant -2.000000e+00 : f32
    %c0_i32_1 = arith.constant 0 : i32
    %2 = arith.cmpi ne, %1, %c0_i32_1 : i32
    scf.if %2 {
      %c0_64 = arith.constant 0 : index
      %c0_65 = arith.constant 0 : index
      %272 = vector.load %arg2[%c0_64, %c0_65] : memref<8x32xf32, #tpu.memory_space<vmem>>, vector<8x32xf32>
      %273 = arith.mulf %272, %272 : vector<8x32xf32>
      %cst_66 = arith.constant dense<0.000000e+00> : vector<8xf32>
      %274 = vector.multi_reduction <add>, %273, %cst_66 [1] : vector<8x32xf32> to vector<8xf32>
      %275 = vector.shape_cast %274 : vector<8xf32> to vector<8x1xf32>
      %276 = vector.broadcast %cst : f32 to vector<8x1xf32>
      %277 = arith.maximumf %275, %276 : vector<8x1xf32>
      %278 = math.rsqrt %277 : vector<8x1xf32>
      %279 = vector.broadcast %278 : vector<8x1xf32> to vector<8x32xf32>
      %280 = arith.mulf %272, %279 : vector<8x32xf32>
      %c0_67 = arith.constant 0 : index
      %c0_68 = arith.constant 0 : index
      %281 = vector.load %arg6[%c0_67, %c0_68] : memref<8x32xf32, #tpu.memory_space<vmem>>, vector<8x32xf32>
      tpu.vector_store %arg6[%c0_67, %c0_68], %280 {strides = array<i32>} : memref<8x32xf32, #tpu.memory_space<vmem>>, vector<8x32xf32>,
      %c0_69 = arith.constant 0 : index
      %c0_70 = arith.constant 0 : index
      %282 = vector.load %arg3[%c0_69, %c0_70] : memref<8x32xf32, #tpu.memory_space<vmem>>, vector<8x32xf32>
      %283 = arith.mulf %282, %282 : vector<8x32xf32>
      %cst_71 = arith.constant dense<0.000000e+00> : vector<8xf32>
      %284 = vector.multi_reduction <add>, %283, %cst_71 [1] : vector<8x32xf32> to vector<8xf32>
      %285 = vector.shape_cast %284 : vector<8xf32> to vector<8x1xf32>
      %286 = vector.broadcast %cst : f32 to vector<8x1xf32>
      %287 = arith.maximumf %285, %286 : vector<8x1xf32>
      %288 = math.rsqrt %287 : vector<8x1xf32>
      %289 = vector.broadcast %288 : vector<8x1xf32> to vector<8x32xf32>
      %290 = arith.mulf %282, %289 : vector<8x32xf32>
      %291 = arith.subf %280, %290 : vector<8x32xf32>
      %292 = math.absf %291 : vector<8x32xf32>
      %cst_72 = arith.constant dense<0.000000e+00> : vector<8xf32>
      %293 = vector.multi_reduction <add>, %292, %cst_72 [1] : vector<8x32xf32> to vector<8xf32>
      %294 = vector.shape_cast %293 : vector<8xf32> to vector<8x1xf32>
      %295 = vector.broadcast %cst_0 : f32 to vector<8x1xf32>
      %296 = arith.mulf %295, %294 : vector<8x1xf32>
      %c0_73 = arith.constant 0 : index
      %c0_74 = arith.constant 0 : index
      %297 = vector.load %arg10[%c0_73, %c0_74] : memref<8x1xf32, #tpu.memory_space<vmem>>, vector<8x1xf32>
      tpu.vector_store %arg10[%c0_73, %c0_74], %296 {strides = array<i32>} : memref<8x1xf32, #tpu.memory_space<vmem>>, vector<8x1xf32>,
      %cst_75 = arith.constant 0xFF800000 : f32
      %298 = vector.broadcast %cst_75 : f32 to vector<8x1xf32>
      %c0_76 = arith.constant 0 : index
      %c0_77 = arith.constant 0 : index
      %299 = vector.load %arg8[%c0_76, %c0_77] : memref<8x1xf32, #tpu.memory_space<vmem>>, vector<8x1xf32>
      tpu.vector_store %arg8[%c0_76, %c0_77], %298 {strides = array<i32>} : memref<8x1xf32, #tpu.memory_space<vmem>>, vector<8x1xf32>,
      %cst_78 = arith.constant 0.000000e+00 : f32
      %300 = vector.broadcast %cst_78 : f32 to vector<8x1xf32>
      %c0_79 = arith.constant 0 : index
      %c0_80 = arith.constant 0 : index
      %301 = vector.load %arg9[%c0_79, %c0_80] : memref<8x1xf32, #tpu.memory_space<vmem>>, vector<8x1xf32>
      tpu.vector_store %arg9[%c0_79, %c0_80], %300 {strides = array<i32>} : memref<8x1xf32, #tpu.memory_space<vmem>>, vector<8x1xf32>,
    } else {
    }
    %c0 = arith.constant 0 : index
    %c0_2 = arith.constant 0 : index
    %3 = vector.load %arg4[%c0, %c0_2] : memref<32x128xf32, #tpu.memory_space<vmem>>, vector<32x128xf32>
    %4 = arith.mulf %3, %3 : vector<32x128xf32>
    %cst_3 = arith.constant dense<0.000000e+00> : vector<128xf32>
    %5 = vector.multi_reduction <add>, %4, %cst_3 [0] : vector<32x128xf32> to vector<128xf32>
    %6 = vector.shape_cast %5 : vector<128xf32> to vector<1x128xf32>
    %cst_4 = arith.constant 1.000000e-24 : f32
    %7 = vector.broadcast %cst_4 : f32 to vector<1x128xf32>
    %8 = arith.maximumf %6, %7 : vector<1x128xf32>
    %9 = math.rsqrt %8 : vector<1x128xf32>
    %10 = vector.broadcast %9 : vector<1x128xf32> to vector<32x128xf32>
    %11 = arith.mulf %3, %10 : vector<32x128xf32>
    %c0_5 = arith.constant 0 : index
    %c0_6 = arith.constant 0 : index
    %12 = vector.load %arg7[%c0_5, %c0_6] : memref<32x128xf32, #tpu.memory_space<vmem>>, vector<32x128xf32>
    tpu.vector_store %arg7[%c0_5, %c0_6], %11 {strides = array<i32>} : memref<32x128xf32, #tpu.memory_space<vmem>>, vector<32x128xf32>,
    %cst_7 = arith.constant 0.000000e+00 : f32
    %13 = vector.broadcast %cst_7 : f32 to vector<8x128xf32>
    %c0_8 = arith.constant 0 : index
    %c0_9 = arith.constant 0 : index
    %14 = vector.load %arg6[%c0_8, %c0_9] : memref<8x32xf32, #tpu.memory_space<vmem>>, vector<8x8xf32>
    %c0_10 = arith.constant 0 : index
    %c0_11 = arith.constant 0 : index
    %15 = vector.load %arg7[%c0_10, %c0_11] : memref<32x128xf32, #tpu.memory_space<vmem>>, vector<1x128xf32>
    %16 = vector.extract_strided_slice %14 {offsets = [0, 0], sizes = [8, 1], strides = [1, 1]} : vector<8x8xf32> to vector<8x1xf32>
    %17 = vector.broadcast %16 : vector<8x1xf32> to vector<8x128xf32>
    %18 = vector.broadcast %15 : vector<1x128xf32> to vector<8x128xf32>
    %19 = arith.subf %17, %18 : vector<8x128xf32>
    %20 = math.absf %19 : vector<8x128xf32>
    %21 = arith.addf %13, %20 : vector<8x128xf32>
    %c1 = arith.constant 1 : index
    %c0_12 = arith.constant 0 : index
    %22 = vector.load %arg7[%c1, %c0_12] : memref<32x128xf32, #tpu.memory_space<vmem>>, vector<1x128xf32>
    %23 = vector.extract_strided_slice %14 {offsets = [0, 1], sizes = [8, 1], strides = [1, 1]} : vector<8x8xf32> to vector<8x1xf32>
    %24 = vector.broadcast %23 : vector<8x1xf32> to vector<8x128xf32>
    %25 = vector.broadcast %22 : vector<1x128xf32> to vector<8x128xf32>
    %26 = arith.subf %24, %25 : vector<8x128xf32>
    %27 = math.absf %26 : vector<8x128xf32>
    %28 = arith.addf %21, %27 : vector<8x128xf32>
    %c2 = arith.constant 2 : index
    %c0_13 = arith.constant 0 : index
    %29 = vector.load %arg7[%c2, %c0_13] : memref<32x128xf32, #tpu.memory_space<vmem>>, vector<1x128xf32>
    %30 = vector.extract_strided_slice %14 {offsets = [0, 2], sizes = [8, 1], strides = [1, 1]} : vector<8x8xf32> to vector<8x1xf32>
    %31 = vector.broadcast %30 : vector<8x1xf32> to vector<8x128xf32>
    %32 = vector.broadcast %29 : vector<1x128xf32> to vector<8x128xf32>
    %33 = arith.subf %31, %32 : vector<8x128xf32>
    %34 = math.absf %33 : vector<8x128xf32>
    %35 = arith.addf %28, %34 : vector<8x128xf32>
    %c3 = arith.constant 3 : index
    %c0_14 = arith.constant 0 : index
    %36 = vector.load %arg7[%c3, %c0_14] : memref<32x128xf32, #tpu.memory_space<vmem>>, vector<1x128xf32>
    %37 = vector.extract_strided_slice %14 {offsets = [0, 3], sizes = [8, 1], strides = [1, 1]} : vector<8x8xf32> to vector<8x1xf32>
    %38 = vector.broadcast %37 : vector<8x1xf32> to vector<8x128xf32>
    %39 = vector.broadcast %36 : vector<1x128xf32> to vector<8x128xf32>
    %40 = arith.subf %38, %39 : vector<8x128xf32>
    %41 = math.absf %40 : vector<8x128xf32>
    %42 = arith.addf %35, %41 : vector<8x128xf32>
    %c4 = arith.constant 4 : index
    %c0_15 = arith.constant 0 : index
    %43 = vector.load %arg7[%c4, %c0_15] : memref<32x128xf32, #tpu.memory_space<vmem>>, vector<1x128xf32>
    %44 = vector.extract_strided_slice %14 {offsets = [0, 4], sizes = [8, 1], strides = [1, 1]} : vector<8x8xf32> to vector<8x1xf32>
    %45 = vector.broadcast %44 : vector<8x1xf32> to vector<8x128xf32>
    %46 = vector.broadcast %43 : vector<1x128xf32> to vector<8x128xf32>
    %47 = arith.subf %45, %46 : vector<8x128xf32>
    %48 = math.absf %47 : vector<8x128xf32>
    %49 = arith.addf %42, %48 : vector<8x128xf32>
    %c5 = arith.constant 5 : index
    %c0_16 = arith.constant 0 : index
    %50 = vector.load %arg7[%c5, %c0_16] : memref<32x128xf32, #tpu.memory_space<vmem>>, vector<1x128xf32>
    %51 = vector.extract_strided_slice %14 {offsets = [0, 5], sizes = [8, 1], strides = [1, 1]} : vector<8x8xf32> to vector<8x1xf32>
    %52 = vector.broadcast %51 : vector<8x1xf32> to vector<8x128xf32>
    %53 = vector.broadcast %50 : vector<1x128xf32> to vector<8x128xf32>
    %54 = arith.subf %52, %53 : vector<8x128xf32>
    %55 = math.absf %54 : vector<8x128xf32>
    %56 = arith.addf %49, %55 : vector<8x128xf32>
    %c6 = arith.constant 6 : index
    %c0_17 = arith.constant 0 : index
    %57 = vector.load %arg7[%c6, %c0_17] : memref<32x128xf32, #tpu.memory_space<vmem>>, vector<1x128xf32>
    %58 = vector.extract_strided_slice %14 {offsets = [0, 6], sizes = [8, 1], strides = [1, 1]} : vector<8x8xf32> to vector<8x1xf32>
    %59 = vector.broadcast %58 : vector<8x1xf32> to vector<8x128xf32>
    %60 = vector.broadcast %57 : vector<1x128xf32> to vector<8x128xf32>
    %61 = arith.subf %59, %60 : vector<8x128xf32>
    %62 = math.absf %61 : vector<8x128xf32>
    %63 = arith.addf %56, %62 : vector<8x128xf32>
    %c7 = arith.constant 7 : index
    %c0_18 = arith.constant 0 : index
    %64 = vector.load %arg7[%c7, %c0_18] : memref<32x128xf32, #tpu.memory_space<vmem>>, vector<1x128xf32>
    %65 = vector.extract_strided_slice %14 {offsets = [0, 7], sizes = [8, 1], strides = [1, 1]} : vector<8x8xf32> to vector<8x1xf32>
    %66 = vector.broadcast %65 : vector<8x1xf32> to vector<8x128xf32>
    %67 = vector.broadcast %64 : vector<1x128xf32> to vector<8x128xf32>
    %68 = arith.subf %66, %67 : vector<8x128xf32>
    %69 = math.absf %68 : vector<8x128xf32>
    %70 = arith.addf %63, %69 : vector<8x128xf32>
    %c0_19 = arith.constant 0 : index
    %c8 = arith.constant 8 : index
    %71 = vector.load %arg6[%c0_19, %c8] : memref<8x32xf32, #tpu.memory_space<vmem>>, vector<8x8xf32>
    %c8_20 = arith.constant 8 : index
    %c0_21 = arith.constant 0 : index
    %72 = vector.load %arg7[%c8_20, %c0_21] : memref<32x128xf32, #tpu.memory_space<vmem>>, vector<1x128xf32>
    %73 = vector.extract_strided_slice %71 {offsets = [0, 0], sizes = [8, 1], strides = [1, 1]} : vector<8x8xf32> to vector<8x1xf32>
    %74 = vector.broadcast %73 : vector<8x1xf32> to vector<8x128xf32>
    %75 = vector.broadcast %72 : vector<1x128xf32> to vector<8x128xf32>
    %76 = arith.subf %74, %75 : vector<8x128xf32>
    %77 = math.absf %76 : vector<8x128xf32>
    %78 = arith.addf %70, %77 : vector<8x128xf32>
    %c9 = arith.constant 9 : index
    %c0_22 = arith.constant 0 : index
    %79 = vector.load %arg7[%c9, %c0_22] : memref<32x128xf32, #tpu.memory_space<vmem>>, vector<1x128xf32>
    %80 = vector.extract_strided_slice %71 {offsets = [0, 1], sizes = [8, 1], strides = [1, 1]} : vector<8x8xf32> to vector<8x1xf32>
    %81 = vector.broadcast %80 : vector<8x1xf32> to vector<8x128xf32>
    %82 = vector.broadcast %79 : vector<1x128xf32> to vector<8x128xf32>
    %83 = arith.subf %81, %82 : vector<8x128xf32>
    %84 = math.absf %83 : vector<8x128xf32>
    %85 = arith.addf %78, %84 : vector<8x128xf32>
    %c10 = arith.constant 10 : index
    %c0_23 = arith.constant 0 : index
    %86 = vector.load %arg7[%c10, %c0_23] : memref<32x128xf32, #tpu.memory_space<vmem>>, vector<1x128xf32>
    %87 = vector.extract_strided_slice %71 {offsets = [0, 2], sizes = [8, 1], strides = [1, 1]} : vector<8x8xf32> to vector<8x1xf32>
    %88 = vector.broadcast %87 : vector<8x1xf32> to vector<8x128xf32>
    %89 = vector.broadcast %86 : vector<1x128xf32> to vector<8x128xf32>
    %90 = arith.subf %88, %89 : vector<8x128xf32>
    %91 = math.absf %90 : vector<8x128xf32>
    %92 = arith.addf %85, %91 : vector<8x128xf32>
    %c11 = arith.constant 11 : index
    %c0_24 = arith.constant 0 : index
    %93 = vector.load %arg7[%c11, %c0_24] : memref<32x128xf32, #tpu.memory_space<vmem>>, vector<1x128xf32>
    %94 = vector.extract_strided_slice %71 {offsets = [0, 3], sizes = [8, 1], strides = [1, 1]} : vector<8x8xf32> to vector<8x1xf32>
    %95 = vector.broadcast %94 : vector<8x1xf32> to vector<8x128xf32>
    %96 = vector.broadcast %93 : vector<1x128xf32> to vector<8x128xf32>
    %97 = arith.subf %95, %96 : vector<8x128xf32>
    %98 = math.absf %97 : vector<8x128xf32>
    %99 = arith.addf %92, %98 : vector<8x128xf32>
    %c12 = arith.constant 12 : index
    %c0_25 = arith.constant 0 : index
    %100 = vector.load %arg7[%c12, %c0_25] : memref<32x128xf32, #tpu.memory_space<vmem>>, vector<1x128xf32>
    %101 = vector.extract_strided_slice %71 {offsets = [0, 4], sizes = [8, 1], strides = [1, 1]} : vector<8x8xf32> to vector<8x1xf32>
    %102 = vector.broadcast %101 : vector<8x1xf32> to vector<8x128xf32>
    %103 = vector.broadcast %100 : vector<1x128xf32> to vector<8x128xf32>
    %104 = arith.subf %102, %103 : vector<8x128xf32>
    %105 = math.absf %104 : vector<8x128xf32>
    %106 = arith.addf %99, %105 : vector<8x128xf32>
    %c13 = arith.constant 13 : index
    %c0_26 = arith.constant 0 : index
    %107 = vector.load %arg7[%c13, %c0_26] : memref<32x128xf32, #tpu.memory_space<vmem>>, vector<1x128xf32>
    %108 = vector.extract_strided_slice %71 {offsets = [0, 5], sizes = [8, 1], strides = [1, 1]} : vector<8x8xf32> to vector<8x1xf32>
    %109 = vector.broadcast %108 : vector<8x1xf32> to vector<8x128xf32>
    %110 = vector.broadcast %107 : vector<1x128xf32> to vector<8x128xf32>
    %111 = arith.subf %109, %110 : vector<8x128xf32>
    %112 = math.absf %111 : vector<8x128xf32>
    %113 = arith.addf %106, %112 : vector<8x128xf32>
    %c14 = arith.constant 14 : index
    %c0_27 = arith.constant 0 : index
    %114 = vector.load %arg7[%c14, %c0_27] : memref<32x128xf32, #tpu.memory_space<vmem>>, vector<1x128xf32>
    %115 = vector.extract_strided_slice %71 {offsets = [0, 6], sizes = [8, 1], strides = [1, 1]} : vector<8x8xf32> to vector<8x1xf32>
    %116 = vector.broadcast %115 : vector<8x1xf32> to vector<8x128xf32>
    %117 = vector.broadcast %114 : vector<1x128xf32> to vector<8x128xf32>
    %118 = arith.subf %116, %117 : vector<8x128xf32>
    %119 = math.absf %118 : vector<8x128xf32>
    %120 = arith.addf %113, %119 : vector<8x128xf32>
    %c15 = arith.constant 15 : index
    %c0_28 = arith.constant 0 : index
    %121 = vector.load %arg7[%c15, %c0_28] : memref<32x128xf32, #tpu.memory_space<vmem>>, vector<1x128xf32>
    %122 = vector.extract_strided_slice %71 {offsets = [0, 7], sizes = [8, 1], strides = [1, 1]} : vector<8x8xf32> to vector<8x1xf32>
    %123 = vector.broadcast %122 : vector<8x1xf32> to vector<8x128xf32>
    %124 = vector.broadcast %121 : vector<1x128xf32> to vector<8x128xf32>
    %125 = arith.subf %123, %124 : vector<8x128xf32>
    %126 = math.absf %125 : vector<8x128xf32>
    %127 = arith.addf %120, %126 : vector<8x128xf32>
    %c0_29 = arith.constant 0 : index
    %c16 = arith.constant 16 : index
    %128 = vector.load %arg6[%c0_29, %c16] : memref<8x32xf32, #tpu.memory_space<vmem>>, vector<8x8xf32>
    %c16_30 = arith.constant 16 : index
    %c0_31 = arith.constant 0 : index
    %129 = vector.load %arg7[%c16_30, %c0_31] : memref<32x128xf32, #tpu.memory_space<vmem>>, vector<1x128xf32>
    %130 = vector.extract_strided_slice %128 {offsets = [0, 0], sizes = [8, 1], strides = [1, 1]} : vector<8x8xf32> to vector<8x1xf32>
    %131 = vector.broadcast %130 : vector<8x1xf32> to vector<8x128xf32>
    %132 = vector.broadcast %129 : vector<1x128xf32> to vector<8x128xf32>
    %133 = arith.subf %131, %132 : vector<8x128xf32>
    %134 = math.absf %133 : vector<8x128xf32>
    %135 = arith.addf %127, %134 : vector<8x128xf32>
    %c17 = arith.constant 17 : index
    %c0_32 = arith.constant 0 : index
    %136 = vector.load %arg7[%c17, %c0_32] : memref<32x128xf32, #tpu.memory_space<vmem>>, vector<1x128xf32>
    %137 = vector.extract_strided_slice %128 {offsets = [0, 1], sizes = [8, 1], strides = [1, 1]} : vector<8x8xf32> to vector<8x1xf32>
    %138 = vector.broadcast %137 : vector<8x1xf32> to vector<8x128xf32>
    %139 = vector.broadcast %136 : vector<1x128xf32> to vector<8x128xf32>
    %140 = arith.subf %138, %139 : vector<8x128xf32>
    %141 = math.absf %140 : vector<8x128xf32>
    %142 = arith.addf %135, %141 : vector<8x128xf32>
    %c18 = arith.constant 18 : index
    %c0_33 = arith.constant 0 : index
    %143 = vector.load %arg7[%c18, %c0_33] : memref<32x128xf32, #tpu.memory_space<vmem>>, vector<1x128xf32>
    %144 = vector.extract_strided_slice %128 {offsets = [0, 2], sizes = [8, 1], strides = [1, 1]} : vector<8x8xf32> to vector<8x1xf32>
    %145 = vector.broadcast %144 : vector<8x1xf32> to vector<8x128xf32>
    %146 = vector.broadcast %143 : vector<1x128xf32> to vector<8x128xf32>
    %147 = arith.subf %145, %146 : vector<8x128xf32>
    %148 = math.absf %147 : vector<8x128xf32>
    %149 = arith.addf %142, %148 : vector<8x128xf32>
    %c19 = arith.constant 19 : index
    %c0_34 = arith.constant 0 : index
    %150 = vector.load %arg7[%c19, %c0_34] : memref<32x128xf32, #tpu.memory_space<vmem>>, vector<1x128xf32>
    %151 = vector.extract_strided_slice %128 {offsets = [0, 3], sizes = [8, 1], strides = [1, 1]} : vector<8x8xf32> to vector<8x1xf32>
    %152 = vector.broadcast %151 : vector<8x1xf32> to vector<8x128xf32>
    %153 = vector.broadcast %150 : vector<1x128xf32> to vector<8x128xf32>
    %154 = arith.subf %152, %153 : vector<8x128xf32>
    %155 = math.absf %154 : vector<8x128xf32>
    %156 = arith.addf %149, %155 : vector<8x128xf32>
    %c20 = arith.constant 20 : index
    %c0_35 = arith.constant 0 : index
    %157 = vector.load %arg7[%c20, %c0_35] : memref<32x128xf32, #tpu.memory_space<vmem>>, vector<1x128xf32>
    %158 = vector.extract_strided_slice %128 {offsets = [0, 4], sizes = [8, 1], strides = [1, 1]} : vector<8x8xf32> to vector<8x1xf32>
    %159 = vector.broadcast %158 : vector<8x1xf32> to vector<8x128xf32>
    %160 = vector.broadcast %157 : vector<1x128xf32> to vector<8x128xf32>
    %161 = arith.subf %159, %160 : vector<8x128xf32>
    %162 = math.absf %161 : vector<8x128xf32>
    %163 = arith.addf %156, %162 : vector<8x128xf32>
    %c21 = arith.constant 21 : index
    %c0_36 = arith.constant 0 : index
    %164 = vector.load %arg7[%c21, %c0_36] : memref<32x128xf32, #tpu.memory_space<vmem>>, vector<1x128xf32>
    %165 = vector.extract_strided_slice %128 {offsets = [0, 5], sizes = [8, 1], strides = [1, 1]} : vector<8x8xf32> to vector<8x1xf32>
    %166 = vector.broadcast %165 : vector<8x1xf32> to vector<8x128xf32>
    %167 = vector.broadcast %164 : vector<1x128xf32> to vector<8x128xf32>
    %168 = arith.subf %166, %167 : vector<8x128xf32>
    %169 = math.absf %168 : vector<8x128xf32>
    %170 = arith.addf %163, %169 : vector<8x128xf32>
    %c22 = arith.constant 22 : index
    %c0_37 = arith.constant 0 : index
    %171 = vector.load %arg7[%c22, %c0_37] : memref<32x128xf32, #tpu.memory_space<vmem>>, vector<1x128xf32>
    %172 = vector.extract_strided_slice %128 {offsets = [0, 6], sizes = [8, 1], strides = [1, 1]} : vector<8x8xf32> to vector<8x1xf32>
    %173 = vector.broadcast %172 : vector<8x1xf32> to vector<8x128xf32>
    %174 = vector.broadcast %171 : vector<1x128xf32> to vector<8x128xf32>
    %175 = arith.subf %173, %174 : vector<8x128xf32>
    %176 = math.absf %175 : vector<8x128xf32>
    %177 = arith.addf %170, %176 : vector<8x128xf32>
    %c23 = arith.constant 23 : index
    %c0_38 = arith.constant 0 : index
    %178 = vector.load %arg7[%c23, %c0_38] : memref<32x128xf32, #tpu.memory_space<vmem>>, vector<1x128xf32>
    %179 = vector.extract_strided_slice %128 {offsets = [0, 7], sizes = [8, 1], strides = [1, 1]} : vector<8x8xf32> to vector<8x1xf32>
    %180 = vector.broadcast %179 : vector<8x1xf32> to vector<8x128xf32>
    %181 = vector.broadcast %178 : vector<1x128xf32> to vector<8x128xf32>
    %182 = arith.subf %180, %181 : vector<8x128xf32>
    %183 = math.absf %182 : vector<8x128xf32>
    %184 = arith.addf %177, %183 : vector<8x128xf32>
    %c0_39 = arith.constant 0 : index
    %c24 = arith.constant 24 : index
    %185 = vector.load %arg6[%c0_39, %c24] : memref<8x32xf32, #tpu.memory_space<vmem>>, vector<8x8xf32>
    %c24_40 = arith.constant 24 : index
    %c0_41 = arith.constant 0 : index
    %186 = vector.load %arg7[%c24_40, %c0_41] : memref<32x128xf32, #tpu.memory_space<vmem>>, vector<1x128xf32>
    %187 = vector.extract_strided_slice %185 {offsets = [0, 0], sizes = [8, 1], strides = [1, 1]} : vector<8x8xf32> to vector<8x1xf32>
    %188 = vector.broadcast %187 : vector<8x1xf32> to vector<8x128xf32>
    %189 = vector.broadcast %186 : vector<1x128xf32> to vector<8x128xf32>
    %190 = arith.subf %188, %189 : vector<8x128xf32>
    %191 = math.absf %190 : vector<8x128xf32>
    %192 = arith.addf %184, %191 : vector<8x128xf32>
    %c25 = arith.constant 25 : index
    %c0_42 = arith.constant 0 : index
    %193 = vector.load %arg7[%c25, %c0_42] : memref<32x128xf32, #tpu.memory_space<vmem>>, vector<1x128xf32>
    %194 = vector.extract_strided_slice %185 {offsets = [0, 1], sizes = [8, 1], strides = [1, 1]} : vector<8x8xf32> to vector<8x1xf32>
    %195 = vector.broadcast %194 : vector<8x1xf32> to vector<8x128xf32>
    %196 = vector.broadcast %193 : vector<1x128xf32> to vector<8x128xf32>
    %197 = arith.subf %195, %196 : vector<8x128xf32>
    %198 = math.absf %197 : vector<8x128xf32>
    %199 = arith.addf %192, %198 : vector<8x128xf32>
    %c26 = arith.constant 26 : index
    %c0_43 = arith.constant 0 : index
    %200 = vector.load %arg7[%c26, %c0_43] : memref<32x128xf32, #tpu.memory_space<vmem>>, vector<1x128xf32>
    %201 = vector.extract_strided_slice %185 {offsets = [0, 2], sizes = [8, 1], strides = [1, 1]} : vector<8x8xf32> to vector<8x1xf32>
    %202 = vector.broadcast %201 : vector<8x1xf32> to vector<8x128xf32>
    %203 = vector.broadcast %200 : vector<1x128xf32> to vector<8x128xf32>
    %204 = arith.subf %202, %203 : vector<8x128xf32>
    %205 = math.absf %204 : vector<8x128xf32>
    %206 = arith.addf %199, %205 : vector<8x128xf32>
    %c27 = arith.constant 27 : index
    %c0_44 = arith.constant 0 : index
    %207 = vector.load %arg7[%c27, %c0_44] : memref<32x128xf32, #tpu.memory_space<vmem>>, vector<1x128xf32>
    %208 = vector.extract_strided_slice %185 {offsets = [0, 3], sizes = [8, 1], strides = [1, 1]} : vector<8x8xf32> to vector<8x1xf32>
    %209 = vector.broadcast %208 : vector<8x1xf32> to vector<8x128xf32>
    %210 = vector.broadcast %207 : vector<1x128xf32> to vector<8x128xf32>
    %211 = arith.subf %209, %210 : vector<8x128xf32>
    %212 = math.absf %211 : vector<8x128xf32>
    %213 = arith.addf %206, %212 : vector<8x128xf32>
    %c28 = arith.constant 28 : index
    %c0_45 = arith.constant 0 : index
    %214 = vector.load %arg7[%c28, %c0_45] : memref<32x128xf32, #tpu.memory_space<vmem>>, vector<1x128xf32>
    %215 = vector.extract_strided_slice %185 {offsets = [0, 4], sizes = [8, 1], strides = [1, 1]} : vector<8x8xf32> to vector<8x1xf32>
    %216 = vector.broadcast %215 : vector<8x1xf32> to vector<8x128xf32>
    %217 = vector.broadcast %214 : vector<1x128xf32> to vector<8x128xf32>
    %218 = arith.subf %216, %217 : vector<8x128xf32>
    %219 = math.absf %218 : vector<8x128xf32>
    %220 = arith.addf %213, %219 : vector<8x128xf32>
    %c29 = arith.constant 29 : index
    %c0_46 = arith.constant 0 : index
    %221 = vector.load %arg7[%c29, %c0_46] : memref<32x128xf32, #tpu.memory_space<vmem>>, vector<1x128xf32>
    %222 = vector.extract_strided_slice %185 {offsets = [0, 5], sizes = [8, 1], strides = [1, 1]} : vector<8x8xf32> to vector<8x1xf32>
    %223 = vector.broadcast %222 : vector<8x1xf32> to vector<8x128xf32>
    %224 = vector.broadcast %221 : vector<1x128xf32> to vector<8x128xf32>
    %225 = arith.subf %223, %224 : vector<8x128xf32>
    %226 = math.absf %225 : vector<8x128xf32>
    %227 = arith.addf %220, %226 : vector<8x128xf32>
    %c30 = arith.constant 30 : index
    %c0_47 = arith.constant 0 : index
    %228 = vector.load %arg7[%c30, %c0_47] : memref<32x128xf32, #tpu.memory_space<vmem>>, vector<1x128xf32>
    %229 = vector.extract_strided_slice %185 {offsets = [0, 6], sizes = [8, 1], strides = [1, 1]} : vector<8x8xf32> to vector<8x1xf32>
    %230 = vector.broadcast %229 : vector<8x1xf32> to vector<8x128xf32>
    %231 = vector.broadcast %228 : vector<1x128xf32> to vector<8x128xf32>
    %232 = arith.subf %230, %231 : vector<8x128xf32>
    %233 = math.absf %232 : vector<8x128xf32>
    %234 = arith.addf %227, %233 : vector<8x128xf32>
    %c31 = arith.constant 31 : index
    %c0_48 = arith.constant 0 : index
    %235 = vector.load %arg7[%c31, %c0_48] : memref<32x128xf32, #tpu.memory_space<vmem>>, vector<1x128xf32>
    %236 = vector.extract_strided_slice %185 {offsets = [0, 7], sizes = [8, 1], strides = [1, 1]} : vector<8x8xf32> to vector<8x1xf32>
    %237 = vector.broadcast %236 : vector<8x1xf32> to vector<8x128xf32>
    %238 = vector.broadcast %235 : vector<1x128xf32> to vector<8x128xf32>
    %239 = arith.subf %237, %238 : vector<8x128xf32>
    %240 = math.absf %239 : vector<8x128xf32>
    %241 = arith.addf %234, %240 : vector<8x128xf32>
    %cst_49 = arith.constant -2.000000e+00 : f32
    %242 = vector.broadcast %cst_49 : f32 to vector<8x128xf32>
    %243 = arith.mulf %242, %241 : vector<8x128xf32>
    %244 = tpu.iota {dimensions = array<i32: 1>} : vector<8x128xi32>
    %c128_i32 = arith.constant 128 : i32
    %245 = arith.muli %arg1, %c128_i32 : i32
    %c0_i32_50 = arith.constant 0 : i32
    %246 = arith.addi %245, %c0_i32_50 : i32
    %247 = vector.broadcast %246 : i32 to vector<8x128xi32>
    %248 = arith.addi %244, %247 : vector<8x128xi32>
    %c8_i32 = arith.constant 8 : i32
    %249 = vector.broadcast %c8_i32 : i32 to vector<8x128xi32>
    %250 = arith.cmpi slt, %248, %249 : vector<8x128xi32>
    %cst_51 = arith.constant 0xFF800000 : f32
    %251 = vector.broadcast %cst_51 : f32 to vector<8x128xf32>
    %252 = arith.select %250, %243, %251 : vector<8x128xi1>, vector<8x128xf32>
    %c0_52 = arith.constant 0 : index
    %c0_53 = arith.constant 0 : index
    %253 = vector.load %arg8[%c0_52, %c0_53] : memref<8x1xf32, #tpu.memory_space<vmem>>, vector<8x1xf32>
    %cst_54 = arith.constant dense<0xFF800000> : vector<8xf32>
    %254 = vector.multi_reduction <maximumf>, %252, %cst_54 [1] : vector<8x128xf32> to vector<8xf32>
    %255 = vector.shape_cast %254 : vector<8xf32> to vector<8x1xf32>
    %256 = arith.maximumf %253, %255 : vector<8x1xf32>
    %257 = arith.subf %253, %256 : vector<8x1xf32>
    %258 = math.exp %257 : vector<8x1xf32>
    %c0_55 = arith.constant 0 : index
    %c0_56 = arith.constant 0 : index
    %259 = vector.load %arg9[%c0_55, %c0_56] : memref<8x1xf32, #tpu.memory_space<vmem>>, vector<8x1xf32>
    %260 = arith.mulf %258, %259 : vector<8x1xf32>
    %261 = vector.broadcast %256 : vector<8x1xf32> to vector<8x128xf32>
    %262 = arith.subf %252, %261 : vector<8x128xf32>
    %263 = math.exp %262 : vector<8x128xf32>
    %cst_57 = arith.constant dense<0.000000e+00> : vector<8xf32>
    %264 = vector.multi_reduction <add>, %263, %cst_57 [1] : vector<8x128xf32> to vector<8xf32>
    %265 = vector.shape_cast %264 : vector<8xf32> to vector<8x1xf32>
    %266 = arith.addf %260, %265 : vector<8x1xf32>
    %c0_58 = arith.constant 0 : index
    %c0_59 = arith.constant 0 : index
    %267 = vector.load %arg9[%c0_58, %c0_59] : memref<8x1xf32, #tpu.memory_space<vmem>>, vector<8x1xf32>
    tpu.vector_store %arg9[%c0_58, %c0_59], %266 {strides = array<i32>} : memref<8x1xf32, #tpu.memory_space<vmem>>, vector<8x1xf32>,
    %c0_60 = arith.constant 0 : index
    %c0_61 = arith.constant 0 : index
    %268 = vector.load %arg8[%c0_60, %c0_61] : memref<8x1xf32, #tpu.memory_space<vmem>>, vector<8x1xf32>
    tpu.vector_store %arg8[%c0_60, %c0_61], %256 {strides = array<i32>} : memref<8x1xf32, #tpu.memory_space<vmem>>, vector<8x1xf32>,
    %c0_i32_62 = arith.constant 0 : i32
    %269 = arith.cmpi eq, %arg1, %c0_i32_62 : i32
    %270 = arith.extui %269 : i1 to i32
    %c0_i32_63 = arith.constant 0 : i32
    %271 = arith.cmpi ne, %270, %c0_i32_63 : i32
    scf.if %271 {
      %c0_64 = arith.constant 0 : index
      %c0_65 = arith.constant 0 : index
      %272 = vector.load %arg8[%c0_64, %c0_65] : memref<8x1xf32, #tpu.memory_space<vmem>>, vector<8x1xf32>
      %c0_66 = arith.constant 0 : index
      %c0_67 = arith.constant 0 : index
      %273 = vector.load %arg9[%c0_66, %c0_67] : memref<8x1xf32, #tpu.memory_space<vmem>>, vector<8x1xf32>
      %274 = math.log %273 : vector<8x1xf32>
      %275 = arith.addf %272, %274 : vector<8x1xf32>
      %c0_68 = arith.constant 0 : index
      %c0_69 = arith.constant 0 : index
      %276 = vector.load %arg10[%c0_68, %c0_69] : memref<8x1xf32, #tpu.memory_space<vmem>>, vector<8x1xf32>
      %277 = arith.subf %275, %276 : vector<8x1xf32>
      %c0_70 = arith.constant 0 : index
      %c0_71 = arith.constant 0 : index
      %278 = vector.load %arg5[%c0_70, %c0_71] : memref<8x1xf32, #tpu.memory_space<vmem>>, vector<8x1xf32>
      tpu.vector_store %arg5[%c0_70, %c0_71], %277 {strides = array<i32>} : memref<8x1xf32, #tpu.memory_space<vmem>>, vector<8x1xf32>,
    } else {
    }
    return
  }
  func.func @transform_0(%arg0: i32, %arg1: i32) -> (i32, i32) {
    %c0_i32 = arith.constant 0 : i32
    %c0_i32_0 = arith.constant 0 : i32
    return %arg0, %c0_i32 : i32, i32
  }
  func.func @transform_1(%arg0: i32, %arg1: i32) -> (i32, i32) {
    %c0_i32 = arith.constant 0 : i32
    %c0_i32_0 = arith.constant 0 : i32
    return %arg0, %c0_i32 : i32, i32
  }
  func.func @transform_2(%arg0: i32, %arg1: i32) -> (i32, i32) {
    %c0_i32 = arith.constant 0 : i32
    %c0_i32_0 = arith.constant 0 : i32
    return %c0_i32, %arg1 : i32, i32
  }
  func.func @transform_3(%arg0: i32, %arg1: i32) -> (i32, i32) {
    %c0_i32 = arith.constant 0 : i32
    %c0_i32_0 = arith.constant 0 : i32
    return %arg0, %c0_i32 : i32, i32
  }
}

</mosaic_0001>

<llo_original>
// kernel: tpu_custom_call.1
$region0: #{tpu_custom_call.1}
  #allocation0 [shape = 'u32[]', space=smem, size = 0x4, offset = 0x4, fixed_abs, tag = 'smem constant byte address 0x4 - core index']
  #allocation1 [shape = 'u32[144,128]{1,0:T(1,128)}', space=vmem, size = 0x12000, scoped, tag = 'internal scratch']
  #allocation2 [shape = 'f32[8,32]{1,0:T(8,128)}', space=vmem, size = 0x1000, scoped, tag = 'scratch operand']
  #allocation3 [shape = 'f32[32,128]{1,0:T(8,128)}', space=vmem, size = 0x4000, scoped, tag = 'scratch operand']
  #allocation4 [shape = 'f32[8,1]{1,0:T(8,128)}', space=vmem, size = 0x1000, scoped, tag = 'scratch operand']
  #allocation5 [shape = 'f32[8,1]{1,0:T(8,128)}', space=vmem, size = 0x1000, scoped, tag = 'scratch operand']
  #allocation6 [shape = 'f32[8,1]{1,0:T(8,128)}', space=vmem, size = 0x1000, scoped, tag = 'scratch operand']
  %s0 = inlined_call_operand.hbm [shape: f32[8,32], index: 0, kind: input, shape index: {}]
  %s1 = inlined_call_operand.hbm [shape: f32[8,32], index: 1, kind: input, shape index: {}]
  %s2 = inlined_call_operand.hbm [shape: f32[32,128], index: 2, kind: input, shape index: {}]
  %s3 = inlined_call_operand.vmem [shape: f32[8,1], index: 3, kind: output, shape index: {}]
  %s4 = sld [smem:[#allocation0]]
  $region42: #{tpu_custom_call.1} parent=0
    _
  %s6 = ssub.s32 1, %s4
  %s7 = scalar_select 0, %s6, %s4
  $region1: #{tpu_custom_call.1} parent=0
    #allocation7 [shape = 'u8[4096]{0}', space=vmem, size = 0x1000, scoped, tag = 'input window, operand 0, single buffered']
    #allocation8 [shape = 's32[1]{0}', space=sflag, size = 0x4, scoped, tag = 'scoped memory for tpu_custom_call.1']
    #allocation9 [shape = 'u8[4096]{0}', space=vmem, size = 0x1000, scoped, tag = 'input window, operand 1, single buffered']
    #allocation10 [shape = 's32[1]{0}', space=sflag, size = 0x4, scoped, tag = 'scoped memory for tpu_custom_call.1']
    #allocation11 [shape = 'u8[16384]{0}', space=vmem, size = 0x4000, scoped, tag = 'input window, operand 2, single buffered']
    %8 = vsyncpa [#allocation8], 0
    %9 = vsyncpa [#allocation10], 0
    // Predicated region
    $region2: #{tpu_custom_call.1} parent=1 // pred_check
      _
    $region3: #{tpu_custom_call.1} parent=1 // pred_check_branch
      %11 = sbr.rel (0) target = $region5
    $region4: #{tpu_custom_call.1} parent=1 // pred_region
      %s13 = ssub.s32 128, 128
      %14 = vsyncadd [#allocation8], %s13
      %s16 = sshll.u32 [#allocation7], 4
      %s17 = int_to_ptr.vmem [resolvable:$true] %s16
      %19 = dma.hbm_to_vmem [thread:$0]  %s0, 128, %s17, [#allocation8]
    $region5: #{tpu_custom_call.1} parent=1 // pred_fallthru
      _
    // Predicated region
    $region6: #{tpu_custom_call.1} parent=1 // pred_check
      _
    $region7: #{tpu_custom_call.1} parent=1 // pred_check_branch
      %21 = sbr.rel (0) target = $region9
    $region8: #{tpu_custom_call.1} parent=1 // pred_region
      %s23 = ssub.s32 128, 128
      %24 = vsyncadd [#allocation10], %s23
      %s26 = sshll.u32 [#allocation9], 4
      %s27 = int_to_ptr.vmem [resolvable:$true] %s26
      %29 = dma.hbm_to_vmem [thread:$0]  %s1, 128, %s27, [#allocation10]
    $region9: #{tpu_custom_call.1} parent=1 // pred_fallthru
      _
    // Predicated region
    $region10: #{tpu_custom_call.1} parent=1 // pred_check
      _
    $region11: #{tpu_custom_call.1} parent=1 // pred_check_branch
      %31 = sbr.rel (0) target = $region13
    $region12: #{tpu_custom_call.1} parent=1 // pred_region
      %s33 = ssub.s32 512, 512
      %34 = vsyncadd [#allocation10], %s33
      %s35 = sshll.u32 [#allocation11], 4
      %s36 = int_to_ptr.vmem [resolvable:$true] %s35
      %41 = dma.hbm_to_vmem [thread:$0]  %s2, 512, %s36, [#allocation10], 128, 128, 8
    $region13: #{tpu_custom_call.1} parent=1 // pred_fallthru
      _
    // Predicated region
    $region14: #{tpu_custom_call.1} parent=1 // pred_check
      _
    $region15: #{tpu_custom_call.1} parent=1 // pred_check_branch
      %43 = sbr.rel (0) target = $region17
    $region16: #{tpu_custom_call.1} parent=1 // pred_region
      %44 = dma.done [#allocation8], 128
    $region17: #{tpu_custom_call.1} parent=1 // pred_fallthru
      _
    // Predicated region
    $region18: #{tpu_custom_call.1} parent=1 // pred_check
      _
    $region19: #{tpu_custom_call.1} parent=1 // pred_check_branch
      %46 = sbr.rel (0) target = $region21
    $region20: #{tpu_custom_call.1} parent=1 // pred_region
      %47 = dma.done [#allocation10], 128
    $region21: #{tpu_custom_call.1} parent=1 // pred_fallthru
      _
    // Predicated region
    $region22: #{tpu_custom_call.1} parent=1 // pred_check
      _
    $region23: #{tpu_custom_call.1} parent=1 // pred_check_branch
      %49 = sbr.rel (0) target = $region25
    $region24: #{tpu_custom_call.1} parent=1 // pred_region
      %50 = dma.done [#allocation10], 512
    $region25: #{tpu_custom_call.1} parent=1 // pred_fallthru
      _
    %p51 = scmp.eq.s32.totalorder 0, 0
    // Predicated region
    $region26: #{tpu_custom_call.1} parent=1 // pred_check
      %p52 = pneg %p51
    $region27: #{tpu_custom_call.1} parent=1 // pred_check_branch
      %54 = sbr.rel (%p52) target = $region29
    $region28: #{tpu_custom_call.1} parent=1 // pred_region
      %v55 = vld [vmem:[#allocation7] sm:$0xff]
      %v56 = vmul.f32 %v55, %v55
      %vm57 = vcmask 261120
      %v58 = vsel %vm57, %v56, 0.0
      %59 = vadd.xlane.f32.xlu0 %v58
      %v60 = vpop.xlane.xlu0 %59
      %v61 = vmax.f32 %v60, 1e-24
      %v62 = vrsqrt.pop %v61
      %v63 = vmul.f32 %v55, %v62
      %64 = vst.msk [vmem:[#allocation2] sm:$0xff] %vm57, %v63
      %v65 = vld [vmem:[#allocation9] sm:$0xff]
      %v66 = vmul.f32 %v65, %v65
      %v67 = vsel %vm57, %v66, 0.0
      %68 = vadd.xlane.f32.xlu0 %v67
      %v69 = vpop.xlane.xlu0 %68
      %v70 = vmax.f32 %v69, 1e-24
      %v71 = vrsqrt.pop %v70
      %v72 = vmul.f32 %v65, %v71
      %v73 = vsub.f32 %v63, %v72
      %v74 = vand.u32 2147483647, %v73
      %v75 = vsel %vm57, %v74, 0.0
      %76 = vadd.xlane.f32.xlu0 %v75
      %v77 = vpop.xlane.xlu0 %76
      %v78 = vmul.f32 %v77, -2.0
      %vm79 = vcmask 7168
      %80 = vst.msk [vmem:[#allocation6] sm:$0xff] %vm79, %v78
      %81 = vst.msk [vmem:[#allocation4] sm:$0xff] %vm79, -inf
      %82 = vst.msk [vmem:[#allocation5] sm:$0xff] %vm79, 0.0
    $region29: #{tpu_custom_call.1} parent=1 // pred_fallthru
      _
    %v83 = vld [vmem:[#allocation11] sm:$0xff]
    %v84 = vld [vmem:[#allocation11 + $0x8] sm:$0xff]
    %v85 = vld [vmem:[#allocation11 + $0x10] sm:$0xff]
    %v86 = vld [vmem:[#allocation11 + $0x18] sm:$0xff]
    %v87 = vmul.f32 %v83, %v83
    %v88 = vmul.f32 %v84, %v84
    %v89 = vmul.f32 %v85, %v85
    %v90 = vmul.f32 %v86, %v86
    %v91 = vadd.f32 %v87, %v88
    %v92 = vadd.f32 %v91, %v89
    %v93 = vadd.f32 %v92, %v90
    %v94 = vrot.slane %v93, 4
    %v95 = vadd.f32 %v93, %v94
    %v96 = vrot.slane %v95, 2
    %v97 = vadd.f32 %v95, %v96
    %v98 = vrot.slane %v97, 1
    %v99 = vadd.f32 %v97, %v98
    %v100 = vmax.f32 %v99, 1e-24
    %v101 = vrsqrt.pop %v100
    %v102 = vmul.f32 %v83, %v101
    %v103 = vmul.f32 %v84, %v101
    %v104 = vmul.f32 %v85, %v101
    %v105 = vmul.f32 %v86, %v101
    %106 = vst [vmem:[#allocation3] sm:$0xff] %v102
    %107 = vst [vmem:[#allocation3 + $0x8] sm:$0xff] %v103
    %108 = vst [vmem:[#allocation3 + $0x10] sm:$0xff] %v104
    %109 = vst [vmem:[#allocation3 + $0x18] sm:$0xff] %v105
    %v110 = vld [vmem:[#allocation2] sm:$0xff]
    %v111 = vld [vmem:[#allocation3] sm:$0x1]
    %113 = vset.pattern.permute.xlu0 0
    %114 = vperm.xlu0 %113, %v110
    %v115 = vpop.permute.xlu0 %114
    %v117 = vlaneseq
    %v118 = vshrl.u32 %v117, 7
    %v119 = vsub.s32 0, %v118
    %v120 = vrot.slane %v111, %v119
    %v121 = vsub.f32 %v115, %v120
    %v122 = vand.u32 2147483647, %v121
    %v123 = vadd.f32 %v122, 0.0
    %v124 = vld [vmem:[#allocation3 + $0x1] sm:$0x1]
    %125 = vset.pattern.permute.xlu0 1
    %126 = vperm.xlu0 %125, %v110
    %v127 = vpop.permute.xlu0 %126
    %v129 = vlaneseq
    %v130 = vshrl.u32 %v129, 7
    %v131 = vsub.s32 0, %v130
    %v132 = vrot.slane %v124, %v131
    %v133 = vsub.f32 %v127, %v132
    %v134 = vand.u32 2147483647, %v133
    %v135 = vadd.f32 %v123, %v134
    %v136 = vld [vmem:[#allocation3 + $0x2] sm:$0x1]
    %137 = vset.pattern.permute.xlu0 2
    %138 = vperm.xlu0 %137, %v110
    %v139 = vpop.permute.xlu0 %138
    %v141 = vlaneseq
    %v142 = vshrl.u32 %v141, 7
    %v143 = vsub.s32 0, %v142
    %v144 = vrot.slane %v136, %v143
    %v145 = vsub.f32 %v139, %v144
    %v146 = vand.u32 2147483647, %v145
    %v147 = vadd.f32 %v135, %v146
    %v148 = vld [vmem:[#allocation3 + $0x3] sm:$0x1]
    %149 = vset.pattern.permute.xlu0 3
    %150 = vperm.xlu0 %149, %v110
    %v151 = vpop.permute.xlu0 %150
    %v153 = vlaneseq
    %v154 = vshrl.u32 %v153, 7
    %v155 = vsub.s32 0, %v154
    %v156 = vrot.slane %v148, %v155
    %v157 = vsub.f32 %v151, %v156
    %v158 = vand.u32 2147483647, %v157
    %v159 = vadd.f32 %v147, %v158
    %v160 = vld [vmem:[#allocation3 + $0x4] sm:$0x1]
    %161 = vset.pattern.permute.xlu0 4
    %162 = vperm.xlu0 %161, %v110
    %v163 = vpop.permute.xlu0 %162
    %v165 = vlaneseq
    %v166 = vshrl.u32 %v165, 7
    %v167 = vsub.s32 0, %v166
    %v168 = vrot.slane %v160, %v167
    %v169 = vsub.f32 %v163, %v168
    %v170 = vand.u32 2147483647, %v169
    %v171 = vadd.f32 %v159, %v170
    %v172 = vld [vmem:[#allocation3 + $0x5] sm:$0x1]
    %173 = vset.pattern.permute.xlu0 5
    %174 = vperm.xlu0 %173, %v110
    %v175 = vpop.permute.xlu0 %174
    %v177 = vlaneseq
    %v178 = vshrl.u32 %v177, 7
    %v179 = vsub.s32 0, %v178
    %v180 = vrot.slane %v172, %v179
    %v181 = vsub.f32 %v175, %v180
    %v182 = vand.u32 2147483647, %v181
    %v183 = vadd.f32 %v171, %v182
    %v184 = vld [vmem:[#allocation3 + $0x6] sm:$0x1]
    %185 = vset.pattern.permute.xlu0 6
    %186 = vperm.xlu0 %185, %v110
    %v187 = vpop.permute.xlu0 %186
    %v189 = vlaneseq
    %v190 = vshrl.u32 %v189, 7
    %v191 = vsub.s32 0, %v190
    %v192 = vrot.slane %v184, %v191
    %v193 = vsub.f32 %v187, %v192
    %v194 = vand.u32 2147483647, %v193
    %v195 = vadd.f32 %v183, %v194
    %v196 = vld [vmem:[#allocation3 + $0x7] sm:$0x1]
    %197 = vset.pattern.permute.xlu0 7
    %198 = vperm.xlu0 %197, %v110
    %v199 = vpop.permute.xlu0 %198
    %v201 = vlaneseq
    %v202 = vshrl.u32 %v201, 7
    %v203 = vsub.s32 0, %v202
    %v204 = vrot.slane %v196, %v203
    %v205 = vsub.f32 %v199, %v204
    %v206 = vand.u32 2147483647, %v205
    %v207 = vadd.f32 %v195, %v206
    %v208 = vld [vmem:[#allocation3 + $0x8] sm:$0x1]
    %209 = vset.pattern.permute.xlu0 8
    %210 = vperm.xlu0 %209, %v110
    %v211 = vpop.permute.xlu0 %210
    %v213 = vlaneseq
    %v214 = vshrl.u32 %v213, 7
    %v215 = vsub.s32 0, %v214
    %v216 = vrot.slane %v208, %v215
    %v217 = vsub.f32 %v211, %v216
    %v218 = vand.u32 2147483647, %v217
    %v219 = vadd.f32 %v207, %v218
    %v220 = vld [vmem:[#allocation3 + $0x9] sm:$0x1]
    %221 = vset.pattern.permute.xlu0 9
    %222 = vperm.xlu0 %221, %v110
    %v223 = vpop.permute.xlu0 %222
    %v225 = vlaneseq
    %v226 = vshrl.u32 %v225, 7
    %v227 = vsub.s32 0, %v226
    %v228 = vrot.slane %v220, %v227
    %v229 = vsub.f32 %v223, %v228
    %v230 = vand.u32 2147483647, %v229
    %v231 = vadd.f32 %v219, %v230
    %v232 = vld [vmem:[#allocation3 + $0xa] sm:$0x1]
    %233 = vset.pattern.permute.xlu0 10
    %234 = vperm.xlu0 %233, %v110
    %v235 = vpop.permute.xlu0 %234
    %v237 = vlaneseq
    %v238 = vshrl.u32 %v237, 7
    %v239 = vsub.s32 0, %v238
    %v240 = vrot.slane %v232, %v239
    %v241 = vsub.f32 %v235, %v240
    %v242 = vand.u32 2147483647, %v241
    %v243 = vadd.f32 %v231, %v242
    %v244 = vld [vmem:[#allocation3 + $0xb] sm:$0x1]
    %245 = vset.pattern.permute.xlu0 11
    %246 = vperm.xlu0 %245, %v110
    %v247 = vpop.permute.xlu0 %246
    %v249 = vlaneseq
    %v250 = vshrl.u32 %v249, 7
    %v251 = vsub.s32 0, %v250
    %v252 = vrot.slane %v244, %v251
    %v253 = vsub.f32 %v247, %v252
    %v254 = vand.u32 2147483647, %v253
    %v255 = vadd.f32 %v243, %v254
    %v256 = vld [vmem:[#allocation3 + $0xc] sm:$0x1]
    %257 = vset.pattern.permute.xlu0 12
    %258 = vperm.xlu0 %257, %v110
    %v259 = vpop.permute.xlu0 %258
    %v261 = vlaneseq
    %v262 = vshrl.u32 %v261, 7
    %v263 = vsub.s32 0, %v262
    %v264 = vrot.slane %v256, %v263
    %v265 = vsub.f32 %v259, %v264
    %v266 = vand.u32 2147483647, %v265
    %v267 = vadd.f32 %v255, %v266
    %v268 = vld [vmem:[#allocation3 + $0xd] sm:$0x1]
    %269 = vset.pattern.permute.xlu0 13
    %270 = vperm.xlu0 %269, %v110
    %v271 = vpop.permute.xlu0 %270
    %v273 = vlaneseq
    %v274 = vshrl.u32 %v273, 7
    %v275 = vsub.s32 0, %v274
    %v276 = vrot.slane %v268, %v275
    %v277 = vsub.f32 %v271, %v276
    %v278 = vand.u32 2147483647, %v277
    %v279 = vadd.f32 %v267, %v278
    %v280 = vld [vmem:[#allocation3 + $0xe] sm:$0x1]
    %281 = vset.pattern.permute.xlu0 14
    %282 = vperm.xlu0 %281, %v110
    %v283 = vpop.permute.xlu0 %282
    %v285 = vlaneseq
    %v286 = vshrl.u32 %v285, 7
    %v287 = vsub.s32 0, %v286
    %v288 = vrot.slane %v280, %v287
    %v289 = vsub.f32 %v283, %v288
    %v290 = vand.u32 2147483647, %v289
    %v291 = vadd.f32 %v279, %v290
    %v292 = vld [vmem:[#allocation3 + $0xf] sm:$0x1]
    %293 = vset.pattern.permute.xlu0 15
    %294 = vperm.xlu0 %293, %v110
    %v295 = vpop.permute.xlu0 %294
    %v297 = vlaneseq
    %v298 = vshrl.u32 %v297, 7
    %v299 = vsub.s32 0, %v298
    %v300 = vrot.slane %v292, %v299
    %v301 = vsub.f32 %v295, %v300
    %v302 = vand.u32 2147483647, %v301
    %v303 = vadd.f32 %v291, %v302
    %v304 = vld [vmem:[#allocation3 + $0x10] sm:$0x1]
    %305 = vset.pattern.permute.xlu0 16
    %306 = vperm.xlu0 %305, %v110
    %v307 = vpop.permute.xlu0 %306
    %v309 = vlaneseq
    %v310 = vshrl.u32 %v309, 7
    %v311 = vsub.s32 0, %v310
    %v312 = vrot.slane %v304, %v311
    %v313 = vsub.f32 %v307, %v312
    %v314 = vand.u32 2147483647, %v313
    %v315 = vadd.f32 %v303, %v314
    %v316 = vld [vmem:[#allocation3 + $0x11] sm:$0x1]
    %317 = vset.pattern.permute.xlu0 17
    %318 = vperm.xlu0 %317, %v110
    %v319 = vpop.permute.xlu0 %318
    %v321 = vlaneseq
    %v322 = vshrl.u32 %v321, 7
    %v323 = vsub.s32 0, %v322
    %v324 = vrot.slane %v316, %v323
    %v325 = vsub.f32 %v319, %v324
    %v326 = vand.u32 2147483647, %v325
    %v327 = vadd.f32 %v315, %v326
    %v328 = vld [vmem:[#allocation3 + $0x12] sm:$0x1]
    %329 = vset.pattern.permute.xlu0 18
    %330 = vperm.xlu0 %329, %v110
    %v331 = vpop.permute.xlu0 %330
    %v333 = vlaneseq
    %v334 = vshrl.u32 %v333, 7
    %v335 = vsub.s32 0, %v334
    %v336 = vrot.slane %v328, %v335
    %v337 = vsub.f32 %v331, %v336
    %v338 = vand.u32 2147483647, %v337
    %v339 = vadd.f32 %v327, %v338
    %v340 = vld [vmem:[#allocation3 + $0x13] sm:$0x1]
    %341 = vset.pattern.permute.xlu0 19
    %342 = vperm.xlu0 %341, %v110
    %v343 = vpop.permute.xlu0 %342
    %v345 = vlaneseq
    %v346 = vshrl.u32 %v345, 7
    %v347 = vsub.s32 0, %v346
    %v348 = vrot.slane %v340, %v347
    %v349 = vsub.f32 %v343, %v348
    %v350 = vand.u32 2147483647, %v349
    %v351 = vadd.f32 %v339, %v350
    %v352 = vld [vmem:[#allocation3 + $0x14] sm:$0x1]
    %353 = vset.pattern.permute.xlu0 20
    %354 = vperm.xlu0 %353, %v110
    %v355 = vpop.permute.xlu0 %354
    %v357 = vlaneseq
    %v358 = vshrl.u32 %v357, 7
    %v359 = vsub.s32 0, %v358
    %v360 = vrot.slane %v352, %v359
    %v361 = vsub.f32 %v355, %v360
    %v362 = vand.u32 2147483647, %v361
    %v363 = vadd.f32 %v351, %v362
    %v364 = vld [vmem:[#allocation3 + $0x15] sm:$0x1]
    %365 = vset.pattern.permute.xlu0 21
    %366 = vperm.xlu0 %365, %v110
    %v367 = vpop.permute.xlu0 %366
    %v369 = vlaneseq
    %v370 = vshrl.u32 %v369, 7
    %v371 = vsub.s32 0, %v370
    %v372 = vrot.slane %v364, %v371
    %v373 = vsub.f32 %v367, %v372
    %v374 = vand.u32 2147483647, %v373
    %v375 = vadd.f32 %v363, %v374
    %v376 = vld [vmem:[#allocation3 + $0x16] sm:$0x1]
    %377 = vset.pattern.permute.xlu0 22
    %378 = vperm.xlu0 %377, %v110
    %v379 = vpop.permute.xlu0 %378
    %v381 = vlaneseq
    %v382 = vshrl.u32 %v381, 7
    %v383 = vsub.s32 0, %v382
    %v384 = vrot.slane %v376, %v383
    %v385 = vsub.f32 %v379, %v384
    %v386 = vand.u32 2147483647, %v385
    %v387 = vadd.f32 %v375, %v386
    %v388 = vld [vmem:[#allocation3 + $0x17] sm:$0x1]
    %389 = vset.pattern.permute.xlu0 23
    %390 = vperm.xlu0 %389, %v110
    %v391 = vpop.permute.xlu0 %390
    %v393 = vlaneseq
    %v394 = vshrl.u32 %v393, 7
    %v395 = vsub.s32 0, %v394
    %v396 = vrot.slane %v388, %v395
    %v397 = vsub.f32 %v391, %v396
    %v398 = vand.u32 2147483647, %v397
    %v399 = vadd.f32 %v387, %v398
    %v400 = vld [vmem:[#allocation3 + $0x18] sm:$0x1]
    %401 = vset.pattern.permute.xlu0 24
    %402 = vperm.xlu0 %401, %v110
    %v403 = vpop.permute.xlu0 %402
    %v405 = vlaneseq
    %v406 = vshrl.u32 %v405, 7
    %v407 = vsub.s32 0, %v406
    %v408 = vrot.slane %v400, %v407
    %v409 = vsub.f32 %v403, %v408
    %v410 = vand.u32 2147483647, %v409
    %v411 = vadd.f32 %v399, %v410
    %v412 = vld [vmem:[#allocation3 + $0x19] sm:$0x1]
    %413 = vset.pattern.permute.xlu0 25
    %414 = vperm.xlu0 %413, %v110
    %v415 = vpop.permute.xlu0 %414
    %v417 = vlaneseq
    %v418 = vshrl.u32 %v417, 7
    %v419 = vsub.s32 0, %v418
    %v420 = vrot.slane %v412, %v419
    %v421 = vsub.f32 %v415, %v420
    %v422 = vand.u32 2147483647, %v421
    %v423 = vadd.f32 %v411, %v422
    %v424 = vld [vmem:[#allocation3 + $0x1a] sm:$0x1]
    %425 = vset.pattern.permute.xlu0 26
    %426 = vperm.xlu0 %425, %v110
    %v427 = vpop.permute.xlu0 %426
    %v429 = vlaneseq
    %v430 = vshrl.u32 %v429, 7
    %v431 = vsub.s32 0, %v430
    %v432 = vrot.slane %v424, %v431
    %v433 = vsub.f32 %v427, %v432
    %v434 = vand.u32 2147483647, %v433
    %v435 = vadd.f32 %v423, %v434
    %v436 = vld [vmem:[#allocation3 + $0x1b] sm:$0x1]
    %437 = vset.pattern.permute.xlu0 27
    %438 = vperm.xlu0 %437, %v110
    %v439 = vpop.permute.xlu0 %438
    %v441 = vlaneseq
    %v442 = vshrl.u32 %v441, 7
    %v443 = vsub.s32 0, %v442
    %v444 = vrot.slane %v436, %v443
    %v445 = vsub.f32 %v439, %v444
    %v446 = vand.u32 2147483647, %v445
    %v447 = vadd.f32 %v435, %v446
    %v448 = vld [vmem:[#allocation3 + $0x1c] sm:$0x1]
    %449 = vset.pattern.permute.xlu0 28
    %450 = vperm.xlu0 %449, %v110
    %v451 = vpop.permute.xlu0 %450
    %v453 = vlaneseq
    %v454 = vshrl.u32 %v453, 7
    %v455 = vsub.s32 0, %v454
    %v456 = vrot.slane %v448, %v455
    %v457 = vsub.f32 %v451, %v456
    %v458 = vand.u32 2147483647, %v457
    %v459 = vadd.f32 %v447, %v458
    %v460 = vld [vmem:[#allocation3 + $0x1d] sm:$0x1]
    %461 = vset.pattern.permute.xlu0 29
    %462 = vperm.xlu0 %461, %v110
    %v463 = vpop.permute.xlu0 %462
    %v465 = vlaneseq
    %v466 = vshrl.u32 %v465, 7
    %v467 = vsub.s32 0, %v466
    %v468 = vrot.slane %v460, %v467
    %v469 = vsub.f32 %v463, %v468
    %v470 = vand.u32 2147483647, %v469
    %v471 = vadd.f32 %v459, %v470
    %v472 = vld [vmem:[#allocation3 + $0x1e] sm:$0x1]
    %473 = vset.pattern.permute.xlu0 30
    %474 = vperm.xlu0 %473, %v110
    %v475 = vpop.permute.xlu0 %474
    %v477 = vlaneseq
    %v478 = vshrl.u32 %v477, 7
    %v479 = vsub.s32 0, %v478
    %v480 = vrot.slane %v472, %v479
    %v481 = vsub.f32 %v475, %v480
    %v482 = vand.u32 2147483647, %v481
    %v483 = vadd.f32 %v471, %v482
    %v484 = vld [vmem:[#allocation3 + $0x1f] sm:$0x1]
    %485 = vset.pattern.permute.xlu0 31
    %486 = vperm.xlu0 %485, %v110
    %v487 = vpop.permute.xlu0 %486
    %v489 = vlaneseq
    %v490 = vshrl.u32 %v489, 7
    %v491 = vsub.s32 0, %v490
    %v492 = vrot.slane %v484, %v491
    %v493 = vsub.f32 %v487, %v492
    %v494 = vand.u32 2147483647, %v493
    %v495 = vadd.f32 %v483, %v494
    %v496 = vmul.f32 %v495, -2.0
    %v497 = vlaneseq
    %v498 = vand.u32 %v497, 127
    %s499 = smul.u32 0, 128
    %v500 = vstv %s499
    %v501 = vadd.s32 %v498, %v500
    %vm502 = vcmp.lt.s32.totalorder %v501, 8
    %v503 = vsel %vm502, %v496, -inf
    %v504 = vld [vmem:[#allocation4] sm:$0xff]
    %505 = vmax.xlane.f32.xlu0 %v503
    %v506 = vpop.xlane.xlu0 %505
    %v507 = vmax.f32 %v504, %v506
    %v508 = vsub.f32 %v504, %v507
    %v509 = vmul.f32 %v508, 1.442695
    %v510 = vpow.pop %v509
    %v511 = vld [vmem:[#allocation5] sm:$0xff]
    %v512 = vmul.f32 %v510, %v511
    %514 = vset.pattern.permute.xlu0 0
    %515 = vperm.xlu0 %514, %v507
    %v516 = vpop.permute.xlu0 %515
    %v518 = vsub.f32 %v503, %v516
    %v519 = vmul.f32 %v518, 1.442695
    %v520 = vpow.pop %v519
    %521 = vadd.xlane.f32.xlu0 %v520
    %v522 = vpop.xlane.xlu0 %521
    %v523 = vadd.f32 %v512, %v522
    %vm524 = vcmask 7168
    %525 = vst.msk [vmem:[#allocation5] sm:$0xff] %vm524, %v523
    %526 = vst.msk [vmem:[#allocation4] sm:$0xff] %vm524, %v507
    // Predicated region
    $region30: #{tpu_custom_call.1} parent=1 // pred_check
      %p527 = pneg %p51
    $region31: #{tpu_custom_call.1} parent=1 // pred_check_branch
      %529 = sbr.rel (%p527) target = $region33
    $region32: #{tpu_custom_call.1} parent=1 // pred_region
      %v530 = vld [vmem:[#allocation4] sm:$0xff]
      %v531 = vld [vmem:[#allocation5] sm:$0xff]
      %v532 = vlog2.pop %v531
      %v533 = vmul.f32 %v532, 0.6931472
      %v534 = vadd.f32 %v530, %v533
      %v535 = vld [vmem:[#allocation6] sm:$0xff]
      %v536 = vsub.f32 %v534, %v535
      %537 = vst.msk [vmem:[%s3] sm:$0xff] %vm524, %v536
    $region33: #{tpu_custom_call.1} parent=1 // pred_fallthru
      _
    // Predicated region
    $region34: #{tpu_custom_call.1} parent=1 // pred_check
      _
    $region35: #{tpu_custom_call.1} parent=1 // pred_check_branch
      %539 = sbr.rel (0) target = $region37
    $region36: #{tpu_custom_call.1} parent=1 // pred_region
      _
    $region37: #{tpu_custom_call.1} parent=1 // pred_fallthru
      _
    // Predicated region
    $region38: #{tpu_custom_call.1} parent=1 // pred_check
      _
    $region39: #{tpu_custom_call.1} parent=1 // pred_check_branch
      %541 = sbr.rel (0) target = $region41
    $region40: #{tpu_custom_call.1} parent=1 // pred_region
      _
    $region41: #{tpu_custom_call.1} parent=1 // pred_fallthru
      _
    %542 = vsyncpa [#allocation8], 1
    %543 = vsyncpa [#allocation10], 1

</llo_original>
